<compile_context>
chip_gen: v6e
topology: v6e:2x2x1
jax: 0.10.0
libtpu: 0.0.40
codegen_flags: <defaults>
</compile_context>

<pallas_src>
import jax
import jax.numpy as jnp
from jax.experimental import pallas as pl
from jax.experimental.pallas import tpu as pltpu


def _round_up(x, m):
    return ((x + m - 1) // m) * m


def _pick_block_b(B, sublane, max_block=512):
    """Sublane-aligned batch tile. Tiny batch -> one block (step overhead dominates);
    moderate batch -> 2 grid steps (pipelining / v7x 2nd TC); large batch -> fixed
    <=512-row tiles (measured ~85% of HBM roofline)."""
    bb = _round_up(B, sublane)
    if bb <= 2 * sublane:
        return bb
    if bb <= max_block:
        return _round_up(-(-bb // 2), sublane)     # at least 2 grid steps
    return max_block


def _mlp_kernel(x_ref, w1_ref, w2_ref, w3_ref, b12_ref, b3_ref, o_ref):
    # Whole hot path (3 matmuls + 2 ReLUs + bias adds) on MXU/VPU in VMEM.
    # Accumulation is always f32; any narrowing casts happen in-kernel.
    x = x_ref[...]
    if x.dtype != w1_ref.dtype:
        x = x.astype(w1_ref.dtype)                 # in-kernel cast: no extra HBM pass
    b12 = b12_ref[...]                             # (2, H) f32: rows = b1, b2

    h1 = jnp.dot(x, w1_ref[...], preferred_element_type=jnp.float32) + b12[0:1, :]
    h1 = jnp.maximum(h1, 0.0)
    if h1.dtype != w2_ref.dtype:
        h1 = h1.astype(w2_ref.dtype)

    h2 = jnp.dot(h1, w2_ref[...], preferred_element_type=jnp.float32) + b12[1:2, :]
    h2 = jnp.maximum(h2, 0.0)
    if h2.dtype != w3_ref.dtype:
        h2 = h2.astype(w3_ref.dtype)

    out = jnp.dot(h2, w3_ref[...], preferred_element_type=jnp.float32) + b3_ref[...]
    o_ref[...] = out.astype(o_ref.dtype)


def prepare_params(params, *, use_bf16=False, pad_hidden=False):
    """One-time parameter plumbing (call once, reuse across forward calls):
    f32 bias rows concatenated to (2, H), optional hidden-dim zero-padding to a lane
    multiple (numerically exact through ReLU), optional bf16 weight cast."""
    w1, w2, w3 = params["w1"], params["w2"], params["w3"]
    b1 = params["b1"].reshape(1, -1).astype(jnp.float32)
    b2 = params["b2"].reshape(1, -1).astype(jnp.float32)
    b3 = params["b3"].reshape(1, -1).astype(jnp.float32)

    if pad_hidden:
        H = w1.shape[1]
        Hp = _round_up(H, 128)
        if Hp != H:
            dh = Hp - H
            w1 = jnp.pad(w1, ((0, 0), (0, dh)))
            w2 = jnp.pad(w2, ((0, dh), (0, dh)))
            w3 = jnp.pad(w3, ((0, dh), (0, 0)))
            b1 = jnp.pad(b1, ((0, 0), (0, dh)))
            b2 = jnp.pad(b2, ((0, 0), (0, dh)))

    b12 = jnp.concatenate([b1, b2], axis=0)        # (2, H)

    cdt = jnp.bfloat16 if use_bf16 else w1.dtype   # bf16 pays on v5e/v6e/v7x alike
    return {
        "w1": w1.astype(cdt), "w2": w2.astype(cdt), "w3": w3.astype(cdt),
        "b12": b12, "b3": b3,
    }


def task_model_forward(obs, prep, *, block_b=None):
    """obs: (B, obs_dim). prep: output of prepare_params (weights (in, out))."""
    B, obs_dim = obs.shape
    w1, w2, w3 = prep["w1"], prep["w2"], prep["w3"]
    b12, b3 = prep["b12"], prep["b3"]
    H = w1.shape[1]
    task_dim = w3.shape[1]
    out_dtype = obs.dtype

    # ---- batch tiling: fixed sublane-aligned tile + wrapper-side row padding ----
    sublane = 16 if obs.dtype == jnp.bfloat16 else 8
    if block_b is None:
        block_b = _pick_block_b(B, sublane)
    B_pad = _round_up(B, block_b)
    x = obs if B_pad == B else jnp.pad(obs, ((0, B_pad - B), (0, 0)))
    grid = (B_pad // block_b,)

    # Weights/biases: constant index_map -> single-buffered, fully resident.
    resident = lambda a: pl.BlockSpec(a.shape, lambda i: (0, 0),
                                      pipeline_mode=pl.Buffered(1))

    x_item = jnp.dtype(obs.dtype).itemsize
    w_item = jnp.dtype(w1.dtype).itemsize

    # ---- explicit VMEM budget (double-buffered I/O tiles, single-buffered weights,
    #      f32 intermediates), capped at v7x's 64 MiB physical per-core VMEM --------
    io_bytes = 2 * block_b * (obs_dim + task_dim) * x_item
    wgt_bytes = (obs_dim * H + H * H + H * task_dim) * w_item + (2 * H + task_dim) * 4
    tmp_bytes = block_b * (2 * H + task_dim) * 4
    vmem_limit = int(min(64 * 1024 * 1024,
                         max(32 * 1024 * 1024,
                             2 * (io_bytes + wgt_bytes + tmp_bytes) + (1 << 20))))

    cost = pl.CostEstimate(
        flops=2 * B_pad * (obs_dim * H + H * H + H * task_dim),
        transcendentals=0,
        bytes_accessed=(x.size * x_item
                        + (w1.size + w2.size + w3.size) * w_item
                        + (b12.size + b3.size) * 4
                        + B_pad * task_dim * x_item),
    )

    out = pl.pallas_call(
        _mlp_kernel,
        out_shape=jax.ShapeDtypeStruct((B_pad, task_dim), out_dtype),
        grid=grid,
        in_specs=[
            pl.BlockSpec((block_b, obs_dim), lambda i: (i, 0)),   # obs tile (pipelined)
            resident(w1), resident(w2), resident(w3),             # weights (1-buffered)
            resident(b12), resident(b3),                          # biases
        ],
        out_specs=pl.BlockSpec((block_b, task_dim), lambda i: (i, 0)),  # unpadded store
        compiler_params=pltpu.CompilerParams(
            dimension_semantics=("parallel",),
            vmem_limit_bytes=vmem_limit,
        ),
        cost_estimate=cost,
    )(x, w1, w2, w3, b12, b3)

    return out if B_pad == B else out[:B]


def init_params(key, obs_dim, task_dim, hidden_dim):
    # Deterministic synthetic init (mimics utils.weight_init: orthogonal W, zero b).
    k1, k2, k3 = jax.random.split(key, 3)
    ortho = jax.nn.initializers.orthogonal()
    return {
        "w1": ortho(k1, (obs_dim, hidden_dim), jnp.float32),
        "b1": jnp.zeros((hidden_dim,), jnp.float32),
        "w2": ortho(k2, (hidden_dim, hidden_dim), jnp.float32),
        "b2": jnp.zeros((hidden_dim,), jnp.float32),
        "w3": ortho(k3, (hidden_dim, task_dim), jnp.float32),
        "b3": jnp.zeros((task_dim,), jnp.float32),
    }


def reference_forward(obs, p):
    h1 = jnp.maximum(obs @ p["w1"] + p["b1"], 0.0)
    h2 = jnp.maximum(h1 @ p["w2"] + p["b2"], 0.0)
    return h2 @ p["w3"] + p["b3"]


if __name__ == "__main__":
    B, obs_dim, hidden_dim, task_dim = 16, 32, 64, 16

    key = jax.random.PRNGKey(0)
    k_obs, k_par, k_obs2 = jax.random.split(key, 3)
    obs = jax.random.normal(k_obs, (B, obs_dim), jnp.float32)
    params = init_params(k_par, obs_dim, task_dim, hidden_dim)
    ref = reference_forward(obs, params)

    # f32 path: exact check against pure-JAX reference.
    prep_f32 = prepare_params(params)                      # hoisted, cached plumbing
    out = jax.block_until_ready(task_model_forward(obs, prep_f32))
    assert out.shape == (B, task_dim)
    assert jnp.allclose(out, ref, atol=1e-5, rtol=1e-5), "f32 mismatch vs reference"

    # bf16 compute (f32 accumulation) + hidden dim padded to a full 128-lane vreg.
    prep_bf16 = prepare_params(params, use_bf16=True, pad_hidden=True)
    out_bf16 = jax.block_until_ready(task_model_forward(obs, prep_bf16))
    assert out_bf16.shape == (B, task_dim)
    assert bool(jnp.all(jnp.isfinite(out_bf16)))
    assert jnp.allclose(out_bf16, ref, atol=5e-2, rtol=5e-2), "bf16 path too far off"

    # Awkward batch size: exercises wrapper-side row padding + multi-step grid.
    B2 = 17
    obs2 = jax.random.normal(k_obs2, (B2, obs_dim), jnp.float32)
    out2 = jax.block_until_ready(task_model_forward(obs2, prep_f32))
    ref2 = reference_forward(obs2, params)
    assert out2.shape == (B2, task_dim)
    assert jnp.allclose(out2, ref2, atol=1e-5, rtol=1e-5), "padded-batch mismatch"

    print("KERNEL_OK")
</pallas_src>

<mosaic_0001>
module attributes {stable_mosaic.version = 11 : i64} {
  func.func @_mlp_kernel(%arg0: i32, %arg1: memref<16x32xf32, #tpu.memory_space<vmem>>, %arg2: memref<32x64xf32, #tpu.memory_space<vmem>>, %arg3: memref<64x64xf32, #tpu.memory_space<vmem>>, %arg4: memref<64x16xf32, #tpu.memory_space<vmem>>, %arg5: memref<2x64xf32, #tpu.memory_space<vmem>>, %arg6: memref<1x16xf32, #tpu.memory_space<vmem>>, %arg7: memref<16x16xf32, #tpu.memory_space<vmem>>) attributes {dimension_semantics = [#tpu.dimension_semantics<parallel>], iteration_bounds = array<i64: 1>, scalar_prefetch = 0 : i64, scratch_operands = 0 : i64, tpu.core_type = #tpu.core_type<tc>, window_params = [{transform_indices = @transform_0, window_bounds = array<i64: 16, 32>}, {pipeline_mode = #tpu.pipeline_mode<synchronous>, transform_indices = @transform_1, window_bounds = array<i64: 32, 64>}, {pipeline_mode = #tpu.pipeline_mode<synchronous>, transform_indices = @transform_2, window_bounds = array<i64: 64, 64>}, {pipeline_mode = #tpu.pipeline_mode<synchronous>, transform_indices = @transform_3, window_bounds = array<i64: 64, 16>}, {pipeline_mode = #tpu.pipeline_mode<synchronous>, transform_indices = @transform_4, window_bounds = array<i64: 2, 64>}, {pipeline_mode = #tpu.pipeline_mode<synchronous>, transform_indices = @transform_5, window_bounds = array<i64: 1, 16>}, {transform_indices = @transform_6, window_bounds = array<i64: 16, 16>}]} {
    %c0 = arith.constant 0 : index
    %c0_0 = arith.constant 0 : index
    %0 = vector.load %arg1[%c0, %c0_0] : memref<16x32xf32, #tpu.memory_space<vmem>>, vector<16x32xf32>
    %c0_1 = arith.constant 0 : index
    %c0_2 = arith.constant 0 : index
    %1 = vector.load %arg5[%c0_1, %c0_2] : memref<2x64xf32, #tpu.memory_space<vmem>>, vector<2x64xf32>
    %c0_3 = arith.constant 0 : index
    %c0_4 = arith.constant 0 : index
    %2 = vector.load %arg2[%c0_3, %c0_4] : memref<32x64xf32, #tpu.memory_space<vmem>>, vector<32x64xf32>
    %cst = arith.constant dense<0.000000e+00> : vector<16x64xf32>
    %3 = tpu.matmul %0, %2, %cst {dimension_numbers = #tpu.dot_dimension_numbers<[1], [0], [0], [1], [0, 0, 1, 1], [], []>} : vector<16x32xf32>, vector<32x64xf32>, vector<16x64xf32> -> vector<16x64xf32>
    %4 = vector.extract_strided_slice %1 {offsets = [0, 0], sizes = [1, 64], strides = [1, 1]} : vector<2x64xf32> to vector<1x64xf32>
    %5 = vector.broadcast %4 : vector<1x64xf32> to vector<16x64xf32>
    %6 = arith.addf %3, %5 : vector<16x64xf32>
    %cst_5 = arith.constant 0.000000e+00 : f32
    %7 = vector.broadcast %cst_5 : f32 to vector<16x64xf32>
    %8 = arith.maximumf %6, %7 : vector<16x64xf32>
    %c0_6 = arith.constant 0 : index
    %c0_7 = arith.constant 0 : index
    %9 = vector.load %arg3[%c0_6, %c0_7] : memref<64x64xf32, #tpu.memory_space<vmem>>, vector<64x64xf32>
    %cst_8 = arith.constant dense<0.000000e+00> : vector<16x64xf32>
    %10 = tpu.matmul %8, %9, %cst_8 {dimension_numbers = #tpu.dot_dimension_numbers<[1], [0], [0], [1], [0, 0, 1, 1], [], []>} : vector<16x64xf32>, vector<64x64xf32>, vector<16x64xf32> -> vector<16x64xf32>
    %11 = vector.extract_strided_slice %1 {offsets = [1, 0], sizes = [1, 64], strides = [1, 1]} : vector<2x64xf32> to vector<1x64xf32>
    %12 = vector.broadcast %11 : vector<1x64xf32> to vector<16x64xf32>
    %13 = arith.addf %10, %12 : vector<16x64xf32>
    %cst_9 = arith.constant 0.000000e+00 : f32
    %14 = vector.broadcast %cst_9 : f32 to vector<16x64xf32>
    %15 = arith.maximumf %13, %14 : vector<16x64xf32>
    %c0_10 = arith.constant 0 : index
    %c0_11 = arith.constant 0 : index
    %16 = vector.load %arg4[%c0_10, %c0_11] : memref<64x16xf32, #tpu.memory_space<vmem>>, vector<64x16xf32>
    %cst_12 = arith.constant dense<0.000000e+00> : vector<16x16xf32>
    %17 = tpu.matmul %15, %16, %cst_12 {dimension_numbers = #tpu.dot_dimension_numbers<[1], [0], [0], [1], [0, 0, 1, 1], [], []>} : vector<16x64xf32>, vector<64x16xf32>, vector<16x16xf32> -> vector<16x16xf32>
    %c0_13 = arith.constant 0 : index
    %c0_14 = arith.constant 0 : index
    %18 = vector.load %arg6[%c0_13, %c0_14] : memref<1x16xf32, #tpu.memory_space<vmem>>, vector<1x16xf32>
    %19 = vector.broadcast %18 : vector<1x16xf32> to vector<16x16xf32>
    %20 = arith.addf %17, %19 : vector<16x16xf32>
    %c0_15 = arith.constant 0 : index
    %c0_16 = arith.constant 0 : index
    %21 = vector.load %arg7[%c0_15, %c0_16] : memref<16x16xf32, #tpu.memory_space<vmem>>, vector<16x16xf32>
    tpu.vector_store %arg7[%c0_15, %c0_16], %20 {strides = array<i32>} : memref<16x16xf32, #tpu.memory_space<vmem>>, vector<16x16xf32>,
    return
  }
  func.func @transform_0(%arg0: i32) -> (i32, i32) {
    %c0_i32 = arith.constant 0 : i32
    %c0_i32_0 = arith.constant 0 : i32
    return %arg0, %c0_i32 : i32, i32
  }
  func.func @transform_1(%arg0: i32) -> (i32, i32) {
    %c0_i32 = arith.constant 0 : i32
    %c0_i32_0 = arith.constant 0 : i32
    %c0_i32_1 = arith.constant 0 : i32
    return %c0_i32, %c0_i32_0 : i32, i32
  }
  func.func @transform_2(%arg0: i32) -> (i32, i32) {
    %c0_i32 = arith.constant 0 : i32
    %c0_i32_0 = arith.constant 0 : i32
    %c0_i32_1 = arith.constant 0 : i32
    return %c0_i32, %c0_i32_0 : i32, i32
  }
  func.func @transform_3(%arg0: i32) -> (i32, i32) {
    %c0_i32 = arith.constant 0 : i32
    %c0_i32_0 = arith.constant 0 : i32
    %c0_i32_1 = arith.constant 0 : i32
    return %c0_i32, %c0_i32_0 : i32, i32
  }
  func.func @transform_4(%arg0: i32) -> (i32, i32) {
    %c0_i32 = arith.constant 0 : i32
    %c0_i32_0 = arith.constant 0 : i32
    %c0_i32_1 = arith.constant 0 : i32
    return %c0_i32, %c0_i32_0 : i32, i32
  }
  func.func @transform_5(%arg0: i32) -> (i32, i32) {
    %c0_i32 = arith.constant 0 : i32
    %c0_i32_0 = arith.constant 0 : i32
    %c0_i32_1 = arith.constant 0 : i32
    return %c0_i32, %c0_i32_0 : i32, i32
  }
  func.func @transform_6(%arg0: i32) -> (i32, i32) {
    %c0_i32 = arith.constant 0 : i32
    %c0_i32_0 = arith.constant 0 : i32
    return %arg0, %c0_i32 : i32, i32
  }
}

</mosaic_0001>

<llo_original>
// kernel: tpu_custom_call.1
$region0: #{tpu_custom_call.1}
  #allocation0 [shape = 'u32[]', space=smem, size = 0x4, offset = 0x4, fixed_abs, tag = 'smem constant byte address 0x4 - core index']
  #allocation1 [shape = 'u32[144,128]{1,0:T(1,128)}', space=vmem, size = 0x12000, scoped, tag = 'internal scratch']
  %s0 = inlined_call_operand.vmem [shape: f32[16,32], index: 0, kind: input, shape index: {}]
  %s1 = inlined_call_operand.hbm [shape: f32[32,64], index: 1, kind: input, shape index: {}]
  %s2 = inlined_call_operand.vmem [shape: f32[64,64], index: 2, kind: input, shape index: {}]
  %s3 = inlined_call_operand.vmem [shape: f32[64,16], index: 3, kind: input, shape index: {}]
  %s4 = inlined_call_operand.vmem [shape: f32[2,64], index: 4, kind: input, shape index: {}]
  %s5 = inlined_call_operand.vmem [shape: f32[1,16], index: 5, kind: input, shape index: {}]
  %s6 = inlined_call_operand.hbm [shape: f32[16,16], index: 6, kind: output, shape index: {}]
  %s7 = sld [smem:[#allocation0]]
  $region38: #{tpu_custom_call.1} parent=0
    _
  %s9 = ssub.s32 1, %s7
  %s10 = scalar_select 0, %s9, %s7
  $region1: #{tpu_custom_call.1} parent=0
    #allocation2 [shape = 'u8[16384]{0}', space=vmem, size = 0x4000, scoped, tag = 'input window, operand 1, single buffered']
    #allocation3 [shape = 's32[1]{0}', space=sflag, size = 0x4, scoped, tag = 'scoped memory for tpu_custom_call.1']
    #allocation4 [shape = 's32[1]{0}', space=sflag, size = 0x4, scoped, tag = 'scoped memory for tpu_custom_call.1']
    #allocation5 [shape = 'u8[8192]{0}', space=vmem, size = 0x2000, scoped, tag = 'output window, operand 0, single buffered']
    %11 = vsyncpa [#allocation3], 0
    %12 = vsyncpa [#allocation4], 0
    // Predicated region
    $region2: #{tpu_custom_call.1} parent=1 // pred_check
      _
    $region3: #{tpu_custom_call.1} parent=1 // pred_check_branch
      %14 = sbr.rel (0) target = $region5
    $region4: #{tpu_custom_call.1} parent=1 // pred_region
      _
    $region5: #{tpu_custom_call.1} parent=1 // pred_fallthru
      _
    // Predicated region
    $region6: #{tpu_custom_call.1} parent=1 // pred_check
      _
    $region7: #{tpu_custom_call.1} parent=1 // pred_check_branch
      %16 = sbr.rel (0) target = $region9
    $region8: #{tpu_custom_call.1} parent=1 // pred_region
      %s18 = ssub.s32 512, 512
      %19 = vsyncadd [#allocation3], %s18
      %s20 = sshll.u32 [#allocation2], 4
      %s21 = int_to_ptr.vmem [resolvable:$true] %s20
      %26 = dma.hbm_to_vmem [thread:$0]  %s1, 512, %s21, [#allocation3], 128, 128, 8
    $region9: #{tpu_custom_call.1} parent=1 // pred_fallthru
      _
    // Predicated region
    $region10: #{tpu_custom_call.1} parent=1 // pred_check
      _
    $region11: #{tpu_custom_call.1} parent=1 // pred_check_branch
      %28 = sbr.rel (0) target = $region13
    $region12: #{tpu_custom_call.1} parent=1 // pred_region
      _
    $region13: #{tpu_custom_call.1} parent=1 // pred_fallthru
      _
    // Predicated region
    $region14: #{tpu_custom_call.1} parent=1 // pred_check
      _
    $region15: #{tpu_custom_call.1} parent=1 // pred_check_branch
      %30 = sbr.rel (0) target = $region17
    $region16: #{tpu_custom_call.1} parent=1 // pred_region
      _
    $region17: #{tpu_custom_call.1} parent=1 // pred_fallthru
      _
    // Predicated region
    $region18: #{tpu_custom_call.1} parent=1 // pred_check
      _
    $region19: #{tpu_custom_call.1} parent=1 // pred_check_branch
      %32 = sbr.rel (0) target = $region21
    $region20: #{tpu_custom_call.1} parent=1 // pred_region
      _
    $region21: #{tpu_custom_call.1} parent=1 // pred_fallthru
      _
    // Predicated region
    $region22: #{tpu_custom_call.1} parent=1 // pred_check
      _
    $region23: #{tpu_custom_call.1} parent=1 // pred_check_branch
      %34 = sbr.rel (0) target = $region25
    $region24: #{tpu_custom_call.1} parent=1 // pred_region
      _
    $region25: #{tpu_custom_call.1} parent=1 // pred_fallthru
      _
    // Predicated region
    $region26: #{tpu_custom_call.1} parent=1 // pred_check
      _
    $region27: #{tpu_custom_call.1} parent=1 // pred_check_branch
      %36 = sbr.rel (0) target = $region29
    $region28: #{tpu_custom_call.1} parent=1 // pred_region
      %37 = dma.done [#allocation3], 512
    $region29: #{tpu_custom_call.1} parent=1 // pred_fallthru
      _
    %v38 = vld [vmem:[%s0] sm:$0xff]
    %v39 = vld [vmem:[%s0 + $0x8] sm:$0xff]
    %v40 = vld [vmem:[%s4] sm:$0x3]
    %v41 = vld [vmem:[#allocation2] sm:$0xff]
    %v42 = vld [vmem:[#allocation2 + $0x8] sm:$0xff]
    %v43 = vld [vmem:[#allocation2 + $0x10] sm:$0xff]
    %v44 = vld [vmem:[#allocation2 + $0x18] sm:$0xff]
    %v45 = vlaneseq
    %v46 = vshrl.u32 %v45, 7
    %v47 = vsub.s32 0, %v46
    %v48 = vrot.slane %v40, %v47
    %vm49 = vcmask 261120
    %v51 = vsel %vm49, %v38, 0
    %v54 = vsel %vm49, %v39, 0
    %56 = vmatprep.subr.mxu0 0.0
    %57 = vmatpush1.msra.mxu0 0.0
    %58 = vmatprep.subr.mxu0 0.0
    %59 = vmatpush1.msra.mxu0 0.0
    %60 = vmatprep.subr.mxu0 0.0
    %61 = vmatpush1.msra.mxu0 0.0
    %62 = vmatprep.subr.mxu0 0.0
    %63 = vmatpush1.msra.mxu0 0.0
    %64 = vmatprep.subr.mxu0 0.0
    %65 = vmatpush1.msra.mxu0 0.0
    %66 = vmatprep.subr.mxu0 0.0
    %67 = vmatpush1.msra.mxu0 0.0
    %68 = vmatprep.subr.mxu0 0.0
    %69 = vmatpush1.msra.mxu0 0.0
    %70 = vmatprep.subr.mxu0 0.0
    %71 = vmatpush1.msra.mxu0 0.0
    %72 = vmatprep.subr.mxu0 0.0
    %73 = vmatpush1.msra.mxu0 0.0
    %74 = vmatprep.subr.mxu0 0.0
    %75 = vmatpush1.msra.mxu0 0.0
    %76 = vmatprep.subr.mxu0 0.0
    %77 = vmatpush1.msra.mxu0 0.0
    %78 = vmatprep.subr.mxu0 0.0
    %79 = vmatpush1.msra.mxu0 0.0
    %80 = vmatprep.subr.mxu0 0.0
    %81 = vmatpush1.msra.mxu0 %v44
    %82 = vmatprep.subr.mxu0 0.0
    %83 = vmatpush1.msra.mxu0 %v43
    %84 = vmatprep.subr.mxu0 0.0
    %85 = vmatpush1.msra.mxu0 %v42
    %86 = vmatprep.subr.mxu0 0.0
    %87 = vmatpush1.msra.mxu0 %v41
    %88 = vmatprep.subr.mxu0 0.0
    %89 = vmatpush2.msra.mxu0 0.0
    %90 = vmatprep.subr.mxu0 0.0
    %91 = vmatpush2.msra.mxu0 0.0
    %92 = vmatprep.subr.mxu0 0.0
    %93 = vmatpush2.msra.mxu0 0.0
    %94 = vmatprep.subr.mxu0 0.0
    %95 = vmatpush2.msra.mxu0 0.0
    %96 = vmatprep.subr.mxu0 0.0
    %97 = vmatpush2.msra.mxu0 0.0
    %98 = vmatprep.subr.mxu0 0.0
    %99 = vmatpush2.msra.mxu0 0.0
    %100 = vmatprep.subr.mxu0 0.0
    %101 = vmatpush2.msra.mxu0 0.0
    %102 = vmatprep.subr.mxu0 0.0
    %103 = vmatpush2.msra.mxu0 0.0
    %104 = vmatprep.subr.mxu0 0.0
    %105 = vmatpush2.msra.mxu0 0.0
    %106 = vmatprep.subr.mxu0 0.0
    %107 = vmatpush2.msra.mxu0 0.0
    %108 = vmatprep.subr.mxu0 0.0
    %109 = vmatpush2.msra.mxu0 0.0
    %110 = vmatprep.subr.mxu0 0.0
    %111 = vmatpush2.msra.mxu0 0.0
    %112 = vmatprep.subr.mxu0 0.0
    %113 = vmatpush2.msra.mxu0 0.0
    %114 = vmatprep.subr.mxu0 0.0
    %115 = vmatpush2.msra.mxu0 0.0
    %116 = vmatprep.subr.mxu0 0.0
    %117 = vmatpush2.msra.mxu0 0.0
    %118 = vmatprep.subr.mxu0 0.0
    %119 = vmatpush2.msra.mxu0 0.0
    %120 = vmatprep.mubr.f32.mxu0 0.0
    %121 = vmatmul.mubr.f32.gmra.mxu0 %v51
    %v122 = vpop.f32.mrf.mxu0
    %v123 = vadd.f32 %v48, %v122
    %v124 = vpop.f32.mrf.mxu0
    %125 = vmatprep.mubr.f32.mxu0 0.0
    %126 = vmatmul.mubr.f32.gmra.mxu0 %v54
    %v127 = vpop.f32.mrf.mxu0
    %v128 = vadd.f32 %v48, %v127
    %v129 = vpop.f32.mrf.mxu0
    %130 = vdwg.mxu0
    %v131 = vmax.f32 %v123, 0.0
    %v132 = vmax.f32 %v128, 0.0
    %v133 = vld [vmem:[%s2] sm:$0xff]
    %v134 = vld [vmem:[%s2 + $0x8] sm:$0xff]
    %v135 = vld [vmem:[%s2 + $0x10] sm:$0xff]
    %v136 = vld [vmem:[%s2 + $0x18] sm:$0xff]
    %v137 = vld [vmem:[%s2 + $0x20] sm:$0xff]
    %v138 = vld [vmem:[%s2 + $0x28] sm:$0xff]
    %v139 = vld [vmem:[%s2 + $0x30] sm:$0xff]
    %v140 = vld [vmem:[%s2 + $0x38] sm:$0xff]
    %v141 = vlaneseq
    %v142 = vshrl.u32 %v141, 7
    %v143 = vsub.s32 1, %v142
    %v144 = vrot.slane %v40, %v143
    %vm145 = vcmask 523264
    %v147 = vsel %vm145, %v131, 0
    %v150 = vsel %vm145, %v132, 0
    %152 = vmatprep.subr.mxu0 0.0
    %153 = vmatpush1.msra.mxu0 0.0
    %154 = vmatprep.subr.mxu0 0.0
    %155 = vmatpush1.msra.mxu0 0.0
    %156 = vmatprep.subr.mxu0 0.0
    %157 = vmatpush1.msra.mxu0 0.0
    %158 = vmatprep.subr.mxu0 0.0
    %159 = vmatpush1.msra.mxu0 0.0
    %160 = vmatprep.subr.mxu0 0.0
    %161 = vmatpush1.msra.mxu0 0.0
    %162 = vmatprep.subr.mxu0 0.0
    %163 = vmatpush1.msra.mxu0 0.0
    %164 = vmatprep.subr.mxu0 0.0
    %165 = vmatpush1.msra.mxu0 0.0
    %166 = vmatprep.subr.mxu0 0.0
    %167 = vmatpush1.msra.mxu0 0.0
    %168 = vmatprep.subr.mxu0 0.0
    %169 = vmatpush1.msra.mxu0 %v140
    %170 = vmatprep.subr.mxu0 0.0
    %171 = vmatpush1.msra.mxu0 %v139
    %172 = vmatprep.subr.mxu0 0.0
    %173 = vmatpush1.msra.mxu0 %v138
    %174 = vmatprep.subr.mxu0 0.0
    %175 = vmatpush1.msra.mxu0 %v137
    %176 = vmatprep.subr.mxu0 0.0
    %177 = vmatpush1.msra.mxu0 %v136
    %178 = vmatprep.subr.mxu0 0.0
    %179 = vmatpush1.msra.mxu0 %v135
    %180 = vmatprep.subr.mxu0 0.0
    %181 = vmatpush1.msra.mxu0 %v134
    %182 = vmatprep.subr.mxu0 0.0
    %183 = vmatpush1.msra.mxu0 %v133
    %184 = vmatprep.subr.mxu0 0.0
    %185 = vmatpush2.msra.mxu0 0.0
    %186 = vmatprep.subr.mxu0 0.0
    %187 = vmatpush2.msra.mxu0 0.0
    %188 = vmatprep.subr.mxu0 0.0
    %189 = vmatpush2.msra.mxu0 0.0
    %190 = vmatprep.subr.mxu0 0.0
    %191 = vmatpush2.msra.mxu0 0.0
    %192 = vmatprep.subr.mxu0 0.0
    %193 = vmatpush2.msra.mxu0 0.0
    %194 = vmatprep.subr.mxu0 0.0
    %195 = vmatpush2.msra.mxu0 0.0
    %196 = vmatprep.subr.mxu0 0.0
    %197 = vmatpush2.msra.mxu0 0.0
    %198 = vmatprep.subr.mxu0 0.0
    %199 = vmatpush2.msra.mxu0 0.0
    %200 = vmatprep.subr.mxu0 0.0
    %201 = vmatpush2.msra.mxu0 0.0
    %202 = vmatprep.subr.mxu0 0.0
    %203 = vmatpush2.msra.mxu0 0.0
    %204 = vmatprep.subr.mxu0 0.0
    %205 = vmatpush2.msra.mxu0 0.0
    %206 = vmatprep.subr.mxu0 0.0
    %207 = vmatpush2.msra.mxu0 0.0
    %208 = vmatprep.subr.mxu0 0.0
    %209 = vmatpush2.msra.mxu0 0.0
    %210 = vmatprep.subr.mxu0 0.0
    %211 = vmatpush2.msra.mxu0 0.0
    %212 = vmatprep.subr.mxu0 0.0
    %213 = vmatpush2.msra.mxu0 0.0
    %214 = vmatprep.subr.mxu0 0.0
    %215 = vmatpush2.msra.mxu0 0.0
    %216 = vmatprep.mubr.f32.mxu0 0.0
    %217 = vmatmul.mubr.f32.gmra.mxu0 %v147
    %v218 = vpop.f32.mrf.mxu0
    %v219 = vadd.f32 %v144, %v218
    %v220 = vpop.f32.mrf.mxu0
    %221 = vmatprep.mubr.f32.mxu0 0.0
    %222 = vmatmul.mubr.f32.gmra.mxu0 %v150
    %v223 = vpop.f32.mrf.mxu0
    %v224 = vadd.f32 %v144, %v223
    %v225 = vpop.f32.mrf.mxu0
    %226 = vdwg.mxu0
    %v227 = vmax.f32 %v219, 0.0
    %v228 = vmax.f32 %v224, 0.0
    %v229 = vld [vmem:[%s3] sm:$0xff]
    %v230 = vld [vmem:[%s3 + $0x8] sm:$0xff]
    %v231 = vld [vmem:[%s3 + $0x10] sm:$0xff]
    %v232 = vld [vmem:[%s3 + $0x18] sm:$0xff]
    %v233 = vld [vmem:[%s3 + $0x20] sm:$0xff]
    %v234 = vld [vmem:[%s3 + $0x28] sm:$0xff]
    %v235 = vld [vmem:[%s3 + $0x30] sm:$0xff]
    %v236 = vld [vmem:[%s3 + $0x38] sm:$0xff]
    %v237 = vld [vmem:[%s5] sm:$0x1]
    %v239 = vlaneseq
    %v240 = vshrl.u32 %v239, 7
    %v241 = vsub.s32 0, %v240
    %v242 = vrot.slane %v237, %v241
    %v245 = vsel %vm145, %v227, 0
    %v248 = vsel %vm145, %v228, 0
    %250 = vmatprep.subr.mxu0 0.0
    %251 = vmatpush1.msra.mxu0 0.0
    %252 = vmatprep.subr.mxu0 0.0
    %253 = vmatpush1.msra.mxu0 0.0
    %254 = vmatprep.subr.mxu0 0.0
    %255 = vmatpush1.msra.mxu0 0.0
    %256 = vmatprep.subr.mxu0 0.0
    %257 = vmatpush1.msra.mxu0 0.0
    %258 = vmatprep.subr.mxu0 0.0
    %259 = vmatpush1.msra.mxu0 0.0
    %260 = vmatprep.subr.mxu0 0.0
    %261 = vmatpush1.msra.mxu0 0.0
    %262 = vmatprep.subr.mxu0 0.0
    %263 = vmatpush1.msra.mxu0 0.0
    %264 = vmatprep.subr.mxu0 0.0
    %265 = vmatpush1.msra.mxu0 0.0
    %266 = vmatprep.subr.mxu0 0.0
    %267 = vmatpush1.msra.mxu0 %v236
    %268 = vmatprep.subr.mxu0 0.0
    %269 = vmatpush1.msra.mxu0 %v235
    %270 = vmatprep.subr.mxu0 0.0
    %271 = vmatpush1.msra.mxu0 %v234
    %272 = vmatprep.subr.mxu0 0.0
    %273 = vmatpush1.msra.mxu0 %v233
    %274 = vmatprep.subr.mxu0 0.0
    %275 = vmatpush1.msra.mxu0 %v232
    %276 = vmatprep.subr.mxu0 0.0
    %277 = vmatpush1.msra.mxu0 %v231
    %278 = vmatprep.subr.mxu0 0.0
    %279 = vmatpush1.msra.mxu0 %v230
    %280 = vmatprep.subr.mxu0 0.0
    %281 = vmatpush1.msra.mxu0 %v229
    %282 = vmatprep.subr.mxu0 0.0
    %283 = vmatpush2.msra.mxu0 0.0
    %284 = vmatprep.subr.mxu0 0.0
    %285 = vmatpush2.msra.mxu0 0.0
    %286 = vmatprep.subr.mxu0 0.0
    %287 = vmatpush2.msra.mxu0 0.0
    %288 = vmatprep.subr.mxu0 0.0
    %289 = vmatpush2.msra.mxu0 0.0
    %290 = vmatprep.subr.mxu0 0.0
    %291 = vmatpush2.msra.mxu0 0.0
    %292 = vmatprep.subr.mxu0 0.0
    %293 = vmatpush2.msra.mxu0 0.0
    %294 = vmatprep.subr.mxu0 0.0
    %295 = vmatpush2.msra.mxu0 0.0
    %296 = vmatprep.subr.mxu0 0.0
    %297 = vmatpush2.msra.mxu0 0.0
    %298 = vmatprep.subr.mxu0 0.0
    %299 = vmatpush2.msra.mxu0 0.0
    %300 = vmatprep.subr.mxu0 0.0
    %301 = vmatpush2.msra.mxu0 0.0
    %302 = vmatprep.subr.mxu0 0.0
    %303 = vmatpush2.msra.mxu0 0.0
    %304 = vmatprep.subr.mxu0 0.0
    %305 = vmatpush2.msra.mxu0 0.0
    %306 = vmatprep.subr.mxu0 0.0
    %307 = vmatpush2.msra.mxu0 0.0
    %308 = vmatprep.subr.mxu0 0.0
    %309 = vmatpush2.msra.mxu0 0.0
    %310 = vmatprep.subr.mxu0 0.0
    %311 = vmatpush2.msra.mxu0 0.0
    %312 = vmatprep.subr.mxu0 0.0
    %313 = vmatpush2.msra.mxu0 0.0
    %314 = vmatprep.mubr.f32.mxu0 0.0
    %315 = vmatmul.mubr.f32.gmra.mxu0 %v245
    %v316 = vpop.f32.mrf.mxu0
    %v317 = vadd.f32 %v242, %v316
    %v318 = vpop.f32.mrf.mxu0
    %319 = vmatprep.mubr.f32.mxu0 0.0
    %320 = vmatmul.mubr.f32.gmra.mxu0 %v248
    %v321 = vpop.f32.mrf.mxu0
    %v322 = vadd.f32 %v242, %v321
    %v323 = vpop.f32.mrf.mxu0
    %324 = vdwg.mxu0
    %vm325 = vcmask 130048
    %326 = vst.msk [vmem:[#allocation5] sm:$0xff] %vm325, %v317
    %327 = vst.msk [vmem:[#allocation5 + $0x8] sm:$0xff] %vm325, %v322
    // Predicated region
    $region30: #{tpu_custom_call.1} parent=1 // pred_check
      _
    $region31: #{tpu_custom_call.1} parent=1 // pred_check_branch
      %329 = sbr.rel (0) target = $region33
    $region32: #{tpu_custom_call.1} parent=1 // pred_region
      %s331 = ssub.s32 256, 256
      %332 = vsyncadd [#allocation4], %s331
      %s333 = sshll.u32 [#allocation5], 4
      %s334 = int_to_ptr.vmem [resolvable:$true] %s333
      %339 = dma.vmem_to_hbm [thread:$0]  %s334, 256, %s6, [#allocation4], 128, 128, 8
    $region33: #{tpu_custom_call.1} parent=1 // pred_fallthru
      _
    // Predicated region
    $region34: #{tpu_custom_call.1} parent=1 // pred_check
      _
    $region35: #{tpu_custom_call.1} parent=1 // pred_check_branch
      %341 = sbr.rel (0) target = $region37
    $region36: #{tpu_custom_call.1} parent=1 // pred_region
      %342 = dma.done [#allocation4], 256
    $region37: #{tpu_custom_call.1} parent=1 // pred_fallthru
      _
    %343 = vsyncpa [#allocation3], 1
    %344 = vsyncpa [#allocation4], 1

</llo_original>
